<compile_context>
chip_gen: v7x
topology: tpu7x:2x2x1
jax: 0.10.0
libtpu: 0.0.40
codegen_flags: <defaults>
</compile_context>

<pallas_src>
import functools
import math

import jax
import jax.numpy as jnp
from jax.experimental import pallas as pl
from jax.experimental.pallas import tpu as pltpu


def _make_divisible(v, divisor, min_value=None):
    if min_value is None:
        min_value = divisor
    new_v = max(min_value, int(v + divisor / 2) // divisor * divisor)
    if new_v < 0.9 * v:
        new_v += divisor
    return new_v


def _se_kernel(x_ref, w1t_ref, b1_ref, w2t_ref, b2_ref, o_ref):
    # x_ref / o_ref: (TB, C, HW) streamed block.
    # w1t_ref: (C, HID), b1_ref: (1, HID) f32, w2t_ref: (HID, C), b2_ref: (1, C) f32.
    inv_hw = 1.0 / x_ref.shape[-1]

    # Squeeze: AdaptiveAvgPool2d(1) == spatial mean, accumulated in f32.
    y = jnp.sum(x_ref[...], axis=-1, dtype=jnp.float32) * inv_hw            # (TB, C)

    # Excite: Linear -> ReLU -> Linear -> h_sigmoid, all f32 on the MXU.
    h = jnp.dot(y, w1t_ref[...], preferred_element_type=jnp.float32) + b1_ref[...]
    h = jnp.maximum(h, 0.0)
    s = jnp.dot(h, w2t_ref[...], preferred_element_type=jnp.float32) + b2_ref[...]
    # h_sigmoid(x) = relu6(x + 3) / 6
    s = jnp.clip(s + 3.0, 0.0, 6.0) * (1.0 / 6.0)                           # (TB, C)

    # Scale: re-read x (short live range) and broadcast-multiply.
    x = x_ref[...]
    if x.dtype == jnp.float32:
        out = x * s[:, :, None]
    else:
        # Narrow-dtype multiply halves vreg/VMEM traffic on v6e/v7x; on v5e the
        # VPU upcasts anyway and the extra cast is noise at this size.
        out = x * s.astype(x.dtype)[:, :, None]
    o_ref[...] = out.astype(o_ref.dtype)


def _pick_tb(B, C, HW, itemsize):
    """Pick batch-rows-per-step and return (tb, vmem_capacity_bytes)."""
    row_bytes = max(1, C * HW * itemsize)
    try:
        vmem_cap = int(pltpu.get_tpu_info().vmem_capacity_bytes)
    except Exception:  # fall back to the smallest generation (v7x: 64 MiB/TC)
        vmem_cap = 64 * 1024 * 1024
    # 2 in + 2 out double-buffered blocks must stay well inside VMEM.
    budget = min(vmem_cap // 4, 16 * 1024 * 1024)
    tb_vmem = max(1, budget // (4 * row_bytes))
    # ~1 MiB streamed block per step amortizes per-step overhead.
    tb_target = max(1, (1 << 20) // row_bytes)
    # Keep >= 2 grid steps so both v7x TensorCores get work.
    tb_cap = max(1, min(tb_vmem, tb_target, (B + 1) // 2))
    divisors = [d for d in range(1, min(tb_cap, B) + 1) if B % d == 0]
    even_grid = [d for d in divisors if (B // d) % 2 == 0]
    tb = max(even_grid) if even_grid else max(divisors)
    return tb, vmem_cap


@functools.partial(jax.jit, static_argnames=("tb", "vmem_limit"))
def _se_layer_impl(x, w1t, b1_2d, w2t, b2_2d, *, tb, vmem_limit):
    B, C, H, W = x.shape
    HW = H * W
    HID = w1t.shape[1]
    x3 = x.reshape(B, C, HW)

    itemsize = jnp.dtype(x.dtype).itemsize
    weight_bytes = (w1t.size * jnp.dtype(w1t.dtype).itemsize
                    + w2t.size * jnp.dtype(w2t.dtype).itemsize
                    + (b1_2d.size + b2_2d.size) * 4)
    cost = pl.CostEstimate(
        flops=B * (2 * C * HW + 4 * C * HID),
        transcendentals=0,
        bytes_accessed=2 * B * C * HW * itemsize + weight_bytes,
    )

    out3 = pl.pallas_call(
        _se_kernel,
        out_shape=jax.ShapeDtypeStruct((B, C, HW), x.dtype),
        grid=(B // tb,),
        in_specs=[
            pl.BlockSpec((tb, C, HW), lambda b: (b, 0, 0)),   # streamed per step
            pl.BlockSpec((C, HID), lambda b: (0, 0)),          # resident
            pl.BlockSpec((1, HID), lambda b: (0, 0)),          # resident
            pl.BlockSpec((HID, C), lambda b: (0, 0)),          # resident
            pl.BlockSpec((1, C), lambda b: (0, 0)),            # resident
        ],
        out_specs=pl.BlockSpec((tb, C, HW), lambda b: (b, 0, 0)),
        compiler_params=pltpu.CompilerParams(
            dimension_semantics=("parallel",),
            vmem_limit_bytes=vmem_limit,
        ),
        cost_estimate=cost,
    )(x3, w1t, b1_2d, w2t, b2_2d)

    return out3.reshape(B, C, H, W)


def se_layer(x, w1t, b1_2d, w2t, b2_2d):
    """SE forward. x: (B, C, H, W) NCHW. Params pre-laid-out by prepare_se_params."""
    B, C, H, W = x.shape
    HW = H * W
    itemsize = jnp.dtype(x.dtype).itemsize
    tb, vmem_cap = _pick_tb(B, C, HW, itemsize)

    weight_bytes = (w1t.size * jnp.dtype(w1t.dtype).itemsize
                    + w2t.size * jnp.dtype(w2t.dtype).itemsize
                    + (b1_2d.size + b2_2d.size) * 4)
    block_bytes = tb * C * HW * itemsize
    # 2x double-buffered input + 2x double-buffered output + weights (x2 for
    # their buffers) + headroom for compiler-internal scratch.
    vmem_need = 4 * block_bytes + 2 * weight_bytes + (4 << 20)
    vmem_limit = int(min(vmem_need, vmem_cap))

    return _se_layer_impl(x, w1t, b1_2d, w2t, b2_2d, tb=tb, vmem_limit=vmem_limit)


def prepare_se_params(w1, b1, w2, b2):
    """One-time layout prep (torch.nn.Linear convention: w1 (HID,C), w2 (C,HID))."""
    HID, C = w1.shape
    w1t = jnp.asarray(w1).T            # (C, HID)
    w2t = jnp.asarray(w2).T            # (HID, C)
    b1_2d = jnp.asarray(b1).reshape(1, HID).astype(jnp.float32)
    b2_2d = jnp.asarray(b2).reshape(1, C).astype(jnp.float32)
    return w1t, b1_2d, w2t, b2_2d


def init_se_params(key, channel, reduction=4, dtype=jnp.float32):
    hidden = _make_divisible(channel // reduction, 8)
    k1, k2, k3, k4 = jax.random.split(key, 4)
    bound1 = 1.0 / math.sqrt(channel)
    bound2 = 1.0 / math.sqrt(hidden)
    w1 = jax.random.uniform(k1, (hidden, channel), dtype, -bound1, bound1)
    b1 = jax.random.uniform(k2, (hidden,), dtype, -bound1, bound1)
    w2 = jax.random.uniform(k3, (channel, hidden), dtype, -bound2, bound2)
    b2 = jax.random.uniform(k4, (channel,), dtype, -bound2, bound2)
    return w1, b1, w2, b2


def se_layer_ref(x, w1, b1, w2, b2):
    """Pure-JAX reference of the PyTorch forward."""
    y = jnp.mean(x.astype(jnp.float32), axis=(2, 3))                  # (B, C)
    h = jnp.maximum(y @ w1.T.astype(jnp.float32) + b1, 0.0)           # (B, HID)
    s = jnp.clip((h @ w2.T.astype(jnp.float32) + b2) + 3.0, 0.0, 6.0) / 6.0
    return (x * s.astype(x.dtype)[:, :, None, None]).astype(x.dtype)


if __name__ == "__main__":
    key = jax.random.PRNGKey(0)
    kx, kp = jax.random.split(key)

    B, C, H, W = 2, 16, 16, 16
    x = jax.random.normal(kx, (B, C, H, W), jnp.float32)
    w1, b1, w2, b2 = init_se_params(kp, C, reduction=4)
    params = prepare_se_params(w1, b1, w2, b2)

    # f32 path
    out = jax.block_until_ready(se_layer(x, *params))
    ref = se_layer_ref(x, w1, b1, w2, b2)
    assert out.shape == (B, C, H, W)
    assert jnp.allclose(out, ref, atol=1e-5, rtol=1e-5), "f32 mismatch vs reference"

    # bf16 path (gate quantized to bf16 before the multiply -> looser tolerance)
    xb = x.astype(jnp.bfloat16)
    out_b = jax.block_until_ready(se_layer(xb, *params))
    ref_b = se_layer_ref(xb, w1, b1, w2, b2).astype(jnp.float32)
    assert jnp.allclose(out_b.astype(jnp.float32), ref_b, atol=3e-2, rtol=3e-2), \
        "bf16 mismatch vs reference"

    print("KERNEL_OK")
</pallas_src>

<mosaic_0001>
module attributes {stable_mosaic.version = 11 : i64} {
  func.func @_se_kernel(%arg0: i32, %arg1: memref<1x16x256xf32, #tpu.memory_space<vmem>>, %arg2: memref<16x8xf32, #tpu.memory_space<vmem>>, %arg3: memref<1x8xf32, #tpu.memory_space<vmem>>, %arg4: memref<8x16xf32, #tpu.memory_space<vmem>>, %arg5: memref<1x16xf32, #tpu.memory_space<vmem>>, %arg6: memref<1x16x256xf32, #tpu.memory_space<vmem>>) attributes {dimension_semantics = [#tpu.dimension_semantics<parallel>], iteration_bounds = array<i64: 2>, scalar_prefetch = 0 : i64, scratch_operands = 0 : i64, tpu.core_type = #tpu.core_type<tc>, window_params = [{transform_indices = @transform_0, window_bounds = array<i64: 1, 16, 256>}, {pipeline_mode = #tpu.pipeline_mode<synchronous>, transform_indices = @transform_1, window_bounds = array<i64: 16, 8>}, {pipeline_mode = #tpu.pipeline_mode<synchronous>, transform_indices = @transform_2, window_bounds = array<i64: 1, 8>}, {pipeline_mode = #tpu.pipeline_mode<synchronous>, transform_indices = @transform_3, window_bounds = array<i64: 8, 16>}, {pipeline_mode = #tpu.pipeline_mode<synchronous>, transform_indices = @transform_4, window_bounds = array<i64: 1, 16>}, {transform_indices = @transform_5, window_bounds = array<i64: 1, 16, 256>}]} {
    %c0 = arith.constant 0 : index
    %c0_0 = arith.constant 0 : index
    %c0_1 = arith.constant 0 : index
    %0 = vector.load %arg1[%c0, %c0_0, %c0_1] : memref<1x16x256xf32, #tpu.memory_space<vmem>>, vector<1x16x256xf32>
    %cst = arith.constant dense<0.000000e+00> : vector<1x16xf32>
    %1 = vector.multi_reduction <add>, %0, %cst [2] : vector<1x16x256xf32> to vector<1x16xf32>
    %cst_2 = arith.constant 3.906250e-03 : f32
    %2 = vector.broadcast %cst_2 : f32 to vector<1x16xf32>
    %3 = arith.mulf %1, %2 : vector<1x16xf32>
    %c0_3 = arith.constant 0 : index
    %c0_4 = arith.constant 0 : index
    %4 = vector.load %arg2[%c0_3, %c0_4] : memref<16x8xf32, #tpu.memory_space<vmem>>, vector<16x8xf32>
    %cst_5 = arith.constant dense<0.000000e+00> : vector<1x8xf32>
    %5 = tpu.matmul %3, %4, %cst_5 {dimension_numbers = #tpu.dot_dimension_numbers<[1], [0], [0], [1], [0, 0, 1, 1], [], []>} : vector<1x16xf32>, vector<16x8xf32>, vector<1x8xf32> -> vector<1x8xf32>
    %c0_6 = arith.constant 0 : index
    %c0_7 = arith.constant 0 : index
    %6 = vector.load %arg3[%c0_6, %c0_7] : memref<1x8xf32, #tpu.memory_space<vmem>>, vector<1x8xf32>
    %7 = arith.addf %5, %6 : vector<1x8xf32>
    %cst_8 = arith.constant 0.000000e+00 : f32
    %8 = vector.broadcast %cst_8 : f32 to vector<1x8xf32>
    %9 = arith.maximumf %7, %8 : vector<1x8xf32>
    %c0_9 = arith.constant 0 : index
    %c0_10 = arith.constant 0 : index
    %10 = vector.load %arg4[%c0_9, %c0_10] : memref<8x16xf32, #tpu.memory_space<vmem>>, vector<8x16xf32>
    %cst_11 = arith.constant dense<0.000000e+00> : vector<1x16xf32>
    %11 = tpu.matmul %9, %10, %cst_11 {dimension_numbers = #tpu.dot_dimension_numbers<[1], [0], [0], [1], [0, 0, 1, 1], [], []>} : vector<1x8xf32>, vector<8x16xf32>, vector<1x16xf32> -> vector<1x16xf32>
    %c0_12 = arith.constant 0 : index
    %c0_13 = arith.constant 0 : index
    %12 = vector.load %arg5[%c0_12, %c0_13] : memref<1x16xf32, #tpu.memory_space<vmem>>, vector<1x16xf32>
    %13 = arith.addf %11, %12 : vector<1x16xf32>
    %cst_14 = arith.constant 3.000000e+00 : f32
    %14 = vector.broadcast %cst_14 : f32 to vector<1x16xf32>
    %15 = arith.addf %13, %14 : vector<1x16xf32>
    %cst_15 = arith.constant 0.000000e+00 : f32
    %cst_16 = arith.constant 6.000000e+00 : f32
    %16 = vector.broadcast %cst_15 : f32 to vector<1x16xf32>
    %17 = arith.maximumf %16, %15 : vector<1x16xf32>
    %18 = vector.broadcast %cst_16 : f32 to vector<1x16xf32>
    %19 = arith.minimumf %18, %17 : vector<1x16xf32>
    %cst_17 = arith.constant 0.166666672 : f32
    %20 = vector.broadcast %cst_17 : f32 to vector<1x16xf32>
    %21 = arith.mulf %19, %20 : vector<1x16xf32>
    %c0_18 = arith.constant 0 : index
    %c0_19 = arith.constant 0 : index
    %c0_20 = arith.constant 0 : index
    %22 = vector.load %arg1[%c0_18, %c0_19, %c0_20] : memref<1x16x256xf32, #tpu.memory_space<vmem>>, vector<1x16x256xf32>
    %23 = vector.shape_cast %21 : vector<1x16xf32> to vector<1x16x1xf32>
    %24 = vector.broadcast %23 : vector<1x16x1xf32> to vector<1x16x256xf32>
    %25 = arith.mulf %22, %24 : vector<1x16x256xf32>
    %c0_21 = arith.constant 0 : index
    %c0_22 = arith.constant 0 : index
    %c0_23 = arith.constant 0 : index
    %26 = vector.load %arg6[%c0_21, %c0_22, %c0_23] : memref<1x16x256xf32, #tpu.memory_space<vmem>>, vector<1x16x256xf32>
    tpu.vector_store %arg6[%c0_21, %c0_22, %c0_23], %25 {strides = array<i32>} : memref<1x16x256xf32, #tpu.memory_space<vmem>>, vector<1x16x256xf32>,
    return
  }
  func.func @transform_0(%arg0: i32) -> (i32, i32, i32) {
    %c0_i32 = arith.constant 0 : i32
    %c0_i32_0 = arith.constant 0 : i32
    %c0_i32_1 = arith.constant 0 : i32
    return %arg0, %c0_i32, %c0_i32_0 : i32, i32, i32
  }
  func.func @transform_1(%arg0: i32) -> (i32, i32) {
    %c0_i32 = arith.constant 0 : i32
    %c0_i32_0 = arith.constant 0 : i32
    %c0_i32_1 = arith.constant 0 : i32
    return %c0_i32, %c0_i32_0 : i32, i32
  }
  func.func @transform_2(%arg0: i32) -> (i32, i32) {
    %c0_i32 = arith.constant 0 : i32
    %c0_i32_0 = arith.constant 0 : i32
    %c0_i32_1 = arith.constant 0 : i32
    return %c0_i32, %c0_i32_0 : i32, i32
  }
  func.func @transform_3(%arg0: i32) -> (i32, i32) {
    %c0_i32 = arith.constant 0 : i32
    %c0_i32_0 = arith.constant 0 : i32
    %c0_i32_1 = arith.constant 0 : i32
    return %c0_i32, %c0_i32_0 : i32, i32
  }
  func.func @transform_4(%arg0: i32) -> (i32, i32) {
    %c0_i32 = arith.constant 0 : i32
    %c0_i32_0 = arith.constant 0 : i32
    %c0_i32_1 = arith.constant 0 : i32
    return %c0_i32, %c0_i32_0 : i32, i32
  }
  func.func @transform_5(%arg0: i32) -> (i32, i32, i32) {
    %c0_i32 = arith.constant 0 : i32
    %c0_i32_0 = arith.constant 0 : i32
    %c0_i32_1 = arith.constant 0 : i32
    return %arg0, %c0_i32, %c0_i32_0 : i32, i32, i32
  }
}

</mosaic_0001>

<llo_original>
// kernel: _se_layer_impl.1
$region0: #{_se_layer_impl.1}
  #allocation0 [shape = 'u32[]', space=smem, size = 0x4, offset = 0x4, fixed_abs, tag = 'smem constant byte address 0x4 - core index']
  #allocation1 [shape = 'u32[144,128]{1,0:T(1,128)}', space=vmem, size = 0x12000, scoped, tag = 'internal scratch']
  %s0 = inlined_call_operand.vmem [shape: f32[2,16,256], index: 0, kind: input, shape index: {}]
  %s1 = inlined_call_operand.vmem [shape: f32[16,8], index: 1, kind: input, shape index: {}]
  %s2 = inlined_call_operand.vmem [shape: f32[1,8], index: 2, kind: input, shape index: {}]
  %s3 = inlined_call_operand.vmem [shape: f32[8,16], index: 3, kind: input, shape index: {}]
  %s4 = inlined_call_operand.vmem [shape: f32[1,16], index: 4, kind: input, shape index: {}]
  %s5 = inlined_call_operand.vmem [shape: f32[2,16,256], index: 5, kind: output, shape index: {}]
  %s6 = sld [smem:[#allocation0]]
  $region53: #{_se_layer_impl.1} parent=0
    _
  %s8 = ssub.s32 1, %s6
  %s9 = scalar_select 0, %s8, %s6
  loop: start=0, step=1, limit=4
  $region2: #{_se_layer_impl.1} parent=0 // loop_pre_header
    _
  $region3: #{_se_layer_impl.1} parent=0 // loop_header
    %s11 = sphi 0, %s15
    %p12 = scmp.ge.s32.totalorder %s11, 4
    %s21 = sphi 0, %s23
    %s24 = sphi 0, %s21
    %s25 = sphi 0, %s24
    %s41 = sphi 0, %s25
    %s45 = sphi 0, %s45
    %s47 = sphi 0, %s45
    %s48 = sphi 0, %s47
    %s62 = sphi 0, %s48
    %s66 = sphi 0, %s66
    %s68 = sphi 0, %s66
    %s69 = sphi 0, %s68
    %s83 = sphi 0, %s69
    %s87 = sphi 0, %s87
    %s89 = sphi 0, %s87
    %s90 = sphi 0, %s89
    %s104 = sphi 0, %s90
    %s108 = sphi 0, %s108
    %s110 = sphi 0, %s108
    %s111 = sphi 0, %s110
    %s125 = sphi 0, %s111
    %s131 = sphi 0, %s133
    %s134 = sphi 0, %s131
    %s135 = sphi 0, %s134
    %s151 = sphi 0, %s135
  $region4: #{_se_layer_impl.1} parent=0 // loop_header_branch
    %14 = sbr.rel (%p12) target = $region8
  $region5: #{_se_layer_impl.1} parent=0 // loop_body
    %s16 = ssub.s32 %s11, 1
    %s17 = ssub.s32 %s11, 2
    %s18 = sadd.s32 %s11, 1
    %s19 = ssub.s32 %s11, %s18
    %p20 = scmp.eq.s32.totalorder %s19, 0
    %s22 = sadd.s32 %s21, 1
    %s23 = scalar_select %p20, %s21, %s22
    %p26 = pneg %p20
    %p27 = scmp.eq.s32.totalorder %s11, 1
    %p28 = por %p26, %p27
    %p29 = scmp.ne.s32.totalorder %s21, %s24
    %p30 = scmp.eq.s32.totalorder %s11, 0
    %p31 = por %p29, %p30
    %p32 = scmp.ne.s32.totalorder %s21, %s24
    %p33 = scmp.eq.s32.totalorder %s16, 1
    %p34 = por %p32, %p33
    %p35 = scmp.ne.s32.totalorder %s24, %s25
    %p36 = scmp.eq.s32.totalorder %s16, 0
    %p37 = por %p35, %p36
    %p38 = scmp.ne.s32.totalorder %s24, %s25
    %p39 = scmp.eq.s32.totalorder %s17, 1
    %p40 = por %p38, %p39
    %p42 = scmp.ne.s32.totalorder %s25, %s41
    %p43 = scmp.eq.s32.totalorder %s17, 0
    %p44 = por %p42, %p43
    %s46 = sadd.s32 %s45, 1
    %p49 = scmp.eq.s32.totalorder %s11, 1
    %p50 = scmp.ne.s32.totalorder %s45, %s47
    %p51 = scmp.eq.s32.totalorder %s11, 0
    %p52 = por %p50, %p51
    %p53 = scmp.ne.s32.totalorder %s45, %s47
    %p54 = scmp.eq.s32.totalorder %s16, 1
    %p55 = por %p53, %p54
    %p56 = scmp.ne.s32.totalorder %s47, %s48
    %p57 = scmp.eq.s32.totalorder %s16, 0
    %p58 = por %p56, %p57
    %p59 = scmp.ne.s32.totalorder %s47, %s48
    %p60 = scmp.eq.s32.totalorder %s17, 1
    %p61 = por %p59, %p60
    %p63 = scmp.ne.s32.totalorder %s48, %s62
    %p64 = scmp.eq.s32.totalorder %s17, 0
    %p65 = por %p63, %p64
    %s67 = sadd.s32 %s66, 1
    %p70 = scmp.eq.s32.totalorder %s11, 1
    %p71 = scmp.ne.s32.totalorder %s66, %s68
    %p72 = scmp.eq.s32.totalorder %s11, 0
    %p73 = por %p71, %p72
    %p74 = scmp.ne.s32.totalorder %s66, %s68
    %p75 = scmp.eq.s32.totalorder %s16, 1
    %p76 = por %p74, %p75
    %p77 = scmp.ne.s32.totalorder %s68, %s69
    %p78 = scmp.eq.s32.totalorder %s16, 0
    %p79 = por %p77, %p78
    %p80 = scmp.ne.s32.totalorder %s68, %s69
    %p81 = scmp.eq.s32.totalorder %s17, 1
    %p82 = por %p80, %p81
    %p84 = scmp.ne.s32.totalorder %s69, %s83
    %p85 = scmp.eq.s32.totalorder %s17, 0
    %p86 = por %p84, %p85
    %s88 = sadd.s32 %s87, 1
    %p91 = scmp.eq.s32.totalorder %s11, 1
    %p92 = scmp.ne.s32.totalorder %s87, %s89
    %p93 = scmp.eq.s32.totalorder %s11, 0
    %p94 = por %p92, %p93
    %p95 = scmp.ne.s32.totalorder %s87, %s89
    %p96 = scmp.eq.s32.totalorder %s16, 1
    %p97 = por %p95, %p96
    %p98 = scmp.ne.s32.totalorder %s89, %s90
    %p99 = scmp.eq.s32.totalorder %s16, 0
    %p100 = por %p98, %p99
    %p101 = scmp.ne.s32.totalorder %s89, %s90
    %p102 = scmp.eq.s32.totalorder %s17, 1
    %p103 = por %p101, %p102
    %p105 = scmp.ne.s32.totalorder %s90, %s104
    %p106 = scmp.eq.s32.totalorder %s17, 0
    %p107 = por %p105, %p106
    %s109 = sadd.s32 %s108, 1
    %p112 = scmp.eq.s32.totalorder %s11, 1
    %p113 = scmp.ne.s32.totalorder %s108, %s110
    %p114 = scmp.eq.s32.totalorder %s11, 0
    %p115 = por %p113, %p114
    %p116 = scmp.ne.s32.totalorder %s108, %s110
    %p117 = scmp.eq.s32.totalorder %s16, 1
    %p118 = por %p116, %p117
    %p119 = scmp.ne.s32.totalorder %s110, %s111
    %p120 = scmp.eq.s32.totalorder %s16, 0
    %p121 = por %p119, %p120
    %p122 = scmp.ne.s32.totalorder %s110, %s111
    %p123 = scmp.eq.s32.totalorder %s17, 1
    %p124 = por %p122, %p123
    %p126 = scmp.ne.s32.totalorder %s111, %s125
    %p127 = scmp.eq.s32.totalorder %s17, 0
    %p128 = por %p126, %p127
    %s129 = ssub.s32 %s11, %s18
    %p130 = scmp.eq.s32.totalorder %s129, 0
    %s132 = sadd.s32 %s131, 1
    %s133 = scalar_select %p130, %s131, %s132
    %p136 = pneg %p130
    %p137 = scmp.eq.s32.totalorder %s11, 1
    %p138 = por %p136, %p137
    %p139 = scmp.ne.s32.totalorder %s131, %s134
    %p140 = scmp.eq.s32.totalorder %s11, 0
    %p141 = por %p139, %p140
    %p142 = scmp.ne.s32.totalorder %s131, %s134
    %p143 = scmp.eq.s32.totalorder %s16, 1
    %p144 = por %p142, %p143
    %p145 = scmp.ne.s32.totalorder %s134, %s135
    %p146 = scmp.eq.s32.totalorder %s16, 0
    %p147 = por %p145, %p146
    %p148 = scmp.ne.s32.totalorder %s134, %s135
    %p149 = scmp.eq.s32.totalorder %s17, 1
    %p150 = por %p148, %p149
    %p152 = scmp.ne.s32.totalorder %s135, %s151
    %p153 = scmp.eq.s32.totalorder %s17, 0
    %p154 = por %p152, %p153
    %p155 = scmp.le.s32.totalorder 1, %s11
    %p156 = scmp.lt.s32.totalorder %s11, 3
    %p157 = pnand %p155, %p156
    %p158 = pneg %p157
    // Predicated region
    $region9: #{_se_layer_impl.1} parent=5 // pred_check
      _
    $region10: #{_se_layer_impl.1} parent=5 // pred_check_branch
      %160 = sbr.rel (%p157) target = $region12
    $region11: #{_se_layer_impl.1} parent=5 // pred_region
      %s161 = ssub.s32 %s11, 1
      // Predicated region
      $region13: #{_se_layer_impl.1} parent=11 // pred_check
        %p162 = pneg %p58
      $region14: #{_se_layer_impl.1} parent=11 // pred_check_branch
        %164 = sbr.rel (%p162) target = $region16
      $region15: #{_se_layer_impl.1} parent=11 // pred_region
        _
      $region16: #{_se_layer_impl.1} parent=11 // pred_fallthru
        _
      // Predicated region
      $region17: #{_se_layer_impl.1} parent=11 // pred_check
        %p165 = pneg %p79
      $region18: #{_se_layer_impl.1} parent=11 // pred_check_branch
        %167 = sbr.rel (%p165) target = $region20
      $region19: #{_se_layer_impl.1} parent=11 // pred_region
        _
      $region20: #{_se_layer_impl.1} parent=11 // pred_fallthru
        _
      // Predicated region
      $region21: #{_se_layer_impl.1} parent=11 // pred_check
        %p168 = pneg %p100
      $region22: #{_se_layer_impl.1} parent=11 // pred_check_branch
        %170 = sbr.rel (%p168) target = $region24
      $region23: #{_se_layer_impl.1} parent=11 // pred_region
        _
      $region24: #{_se_layer_impl.1} parent=11 // pred_fallthru
        _
      // Predicated region
      $region25: #{_se_layer_impl.1} parent=11 // pred_check
        %p171 = pneg %p121
      $region26: #{_se_layer_impl.1} parent=11 // pred_check_branch
        %173 = sbr.rel (%p171) target = $region28
      $region27: #{_se_layer_impl.1} parent=11 // pred_region
        _
      $region28: #{_se_layer_impl.1} parent=11 // pred_fallthru
        _
    $region12: #{_se_layer_impl.1} parent=5 // pred_fallthru
      _
    %p174 = scmp.lt.s32.totalorder %s11, 2
    // Predicated region
    $region29: #{_se_layer_impl.1} parent=5 // pred_check
      %p175 = pneg %p174
    $region30: #{_se_layer_impl.1} parent=5 // pred_check_branch
      %177 = sbr.rel (%p175) target = $region32
    $region31: #{_se_layer_impl.1} parent=5 // pred_region
      // Predicated region
      $region33: #{_se_layer_impl.1} parent=31 // pred_check
        %p178 = pneg %p31
      $region34: #{_se_layer_impl.1} parent=31 // pred_check_branch
        %180 = sbr.rel (%p178) target = $region36
      $region35: #{_se_layer_impl.1} parent=31 // pred_region
        %p181 = scmp.lt.s32.totalorder %s11, 1
        %s182 = scalar_select %p181, %s11, 1
        %s183 = smul.addr %s182, 4
        %s184 = smul.addr %s183, 8
        %s185 = scalar_lea.vmem %s0, %s184
      $region36: #{_se_layer_impl.1} parent=31 // pred_fallthru
        _
    $region32: #{_se_layer_impl.1} parent=5 // pred_fallthru
      _
    %p186 = scmp.le.s32.totalorder 1, %s11
    %p187 = scmp.lt.s32.totalorder %s11, 3
    %p188 = pnand %p186, %p187
    %p189 = pneg %p188
    // Predicated region
    $region37: #{_se_layer_impl.1} parent=5 // pred_check
      _
    $region38: #{_se_layer_impl.1} parent=5 // pred_check_branch
      %191 = sbr.rel (%p188) target = $region40
    $region39: #{_se_layer_impl.1} parent=5 // pred_region
      %s192 = ssub.s32 %s11, 1
      %p193 = scmp.lt.s32.totalorder %s16, 1
      %s194 = scalar_select %p193, %s16, 1
      %s195 = smul.addr %s194, 4
      %s196 = smul.addr %s195, 8
      %s197 = scalar_lea.vmem %s0, %s196
      %p198 = pneg %p37
      %p199 = pneg %p34
      %p200 = pneg %p58
      %p201 = pneg %p55
      %p202 = pneg %p79
      %p203 = pneg %p76
      %p204 = pneg %p100
      %p205 = pneg %p97
      %p206 = pneg %p121
      %p207 = pneg %p118
      %p208 = pneg %p147
      %p209 = pneg %p144
      %p210 = scmp.lt.s32.totalorder %s16, 1
      %s211 = scalar_select %p210, %s16, 1
      %s212 = smul.addr %s211, 4
      %s213 = smul.addr %s212, 8
      %s214 = scalar_lea.vmem %s5, %s213
      %p215 = scmp.lt.s32.totalorder %s16, 1
      %s216 = scalar_select %p215, %s16, 1
      %s217 = smul.addr %s216, 4
      %s218 = smul.addr %s217, 8
      %s219 = scalar_lea.vmem %s0, %s218
      %p220 = scmp.lt.s32.totalorder %s16, 1
      %s221 = scalar_select %p220, %s16, 1
      %s222 = smul.addr %s221, 4
      %s223 = smul.addr %s222, 8
      %s224 = scalar_lea.vmem %s5, %s223
      %v225 = vld [vmem:[%s219] sm:$0xff]
      %v226 = vld [vmem:[%s219 + $0x8] sm:$0xff]
      %v227 = vld [vmem:[%s219 + $0x10] sm:$0xff]
      %v228 = vld [vmem:[%s219 + $0x18] sm:$0xff]
      %v229 = vadd.f32 %v225, %v226
      %230 = vadd.xlane.f32.xlu0 %v229
      %v231 = vpop.xlane.xlu0 %230
      %v232 = vadd.f32 %v227, %v228
      %233 = vadd.xlane.f32.xlu0 %v232
      %v234 = vpop.xlane.xlu0 %233
      %v235 = vmul.f32 %v231, 0.00390625
      %v236 = vmul.f32 %v234, 0.00390625
      %v237 = vld [vmem:[%s1] sm:$0xff]
      %v238 = vld [vmem:[%s1 + $0x8] sm:$0xff]
      %v239 = vld [vmem:[%s2] sm:$0x1]
      %v242 = vlaneseq
      %v243 = vand.u32 %v242, 127
      %v244 = vlaneseq
      %v245 = vshrl.u32 %v244, 7
      %v246 = vsub.s32 %v243, %v245
      %v247 = vrot.slane %v235, %v246
      %v248 = vadd.s32 %v243, 4294967288
      %v249 = vlaneseq
      %v250 = vshrl.u32 %v249, 7
      %v251 = vsub.s32 %v248, %v250
      %v252 = vrot.slane %v236, %v251
      %vm253 = vcmask 130112
      %v254 = vsel %vm253, %v252, %v247
      %vm255 = vcmask 130048
      %v256 = vsel %vm255, %v254, 0
      %258 = vmatprep.subr.mxu0 0.0
      %259 = vmatpush1.msra.mxu0 %v237
      %260 = vmatprep.subr.mxu0 0.0
      %261 = vmatpush1.msra.mxu0 %v238
      %262 = vmatprep.subr.mxu0 0.0
      %263 = vmatpush1.msra.mxu0 0.0
      %264 = vmatprep.subr.mxu0 0.0
      %265 = vmatpush1.msra.mxu0 0.0
      %266 = vmatprep.subr.mxu0 0.0
      %267 = vmatpush1.msra.mxu0 0.0
      %268 = vmatprep.subr.mxu0 0.0
      %269 = vmatpush1.msra.mxu0 0.0
      %270 = vmatprep.subr.mxu0 0.0
      %271 = vmatpush1.msra.mxu0 0.0
      %272 = vmatprep.subr.mxu0 0.0
      %273 = vmatpush1.msra.mxu0 0.0
      %274 = vmatprep.subr.mxu0 0.0
      %275 = vmatpush1.msra.mxu0 0.0
      %276 = vmatprep.subr.mxu0 0.0
      %277 = vmatpush1.msra.mxu0 0.0
      %278 = vmatprep.subr.mxu0 0.0
      %279 = vmatpush1.msra.mxu0 0.0
      %280 = vmatprep.subr.mxu0 0.0
      %281 = vmatpush1.msra.mxu0 0.0
      %282 = vmatprep.subr.mxu0 0.0
      %283 = vmatpush1.msra.mxu0 0.0
      %284 = vmatprep.subr.mxu0 0.0
      %285 = vmatpush1.msra.mxu0 0.0
      %286 = vmatprep.subr.mxu0 0.0
      %287 = vmatpush1.msra.mxu0 0.0
      %288 = vmatprep.subr.mxu0 0.0
      %289 = vmatpush1.msra.mxu0 0.0
      %290 = vmatprep.subr.mxu0 0.0
      %291 = vmatpush1.msra.mxu0 0.0
      %292 = vmatprep.subr.mxu0 0.0
      %293 = vmatpush1.msra.mxu0 0.0
      %294 = vmatprep.subr.mxu0 0.0
      %295 = vmatpush1.msra.mxu0 0.0
      %296 = vmatprep.subr.mxu0 0.0
      %297 = vmatpush1.msra.mxu0 0.0
      %298 = vmatprep.subr.mxu0 0.0
      %299 = vmatpush1.msra.mxu0 0.0
      %300 = vmatprep.subr.mxu0 0.0
      %301 = vmatpush1.msra.mxu0 0.0
      %302 = vmatprep.subr.mxu0 0.0
      %303 = vmatpush1.msra.mxu0 0.0
      %304 = vmatprep.subr.mxu0 0.0
      %305 = vmatpush1.msra.mxu0 0.0
      %306 = vmatprep.subr.mxu0 0.0
      %307 = vmatpush1.msra.mxu0 0.0
      %308 = vmatprep.subr.mxu0 0.0
      %309 = vmatpush1.msra.mxu0 0.0
      %310 = vmatprep.subr.mxu0 0.0
      %311 = vmatpush1.msra.mxu0 0.0
      %312 = vmatprep.subr.mxu0 0.0
      %313 = vmatpush1.msra.mxu0 0.0
      %314 = vmatprep.subr.mxu0 0.0
      %315 = vmatpush1.msra.mxu0 0.0
      %316 = vmatprep.subr.mxu0 0.0
      %317 = vmatpush1.msra.mxu0 0.0
      %318 = vmatprep.subr.mxu0 0.0
      %319 = vmatpush1.msra.mxu0 0.0
      %320 = vmatprep.subr.mxu0 0.0
      %321 = vmatpush1.msra.mxu0 0.0
      %322 = vmatprep.mubr.f32.mxu0 0.0
      %323 = vmatmul.mubr.f32.gmra.mrb[0].mxu0 %v256
      %v324 = vpop.f32.mrb[0].mxu0
      %v325 = vadd.f32 %v239, %v324
      %v326 = vpop.f32.mrb[0].mxu0
      %327 = vdwg.mxu0
      %v328 = vmax.f32 %v325, 0.0
      %v329 = vld [vmem:[%s3] sm:$0xff]
      %v330 = vld [vmem:[%s4] sm:$0x1]
      %vm331 = vcmask 64512
      %v333 = vsel %vm331, %v328, 0
      %335 = vmatprep.subr.mxu0 0.0
      %336 = vmatpush1.msra.mxu0 %v329
      %337 = vmatprep.subr.mxu0 0.0
      %338 = vmatpush1.msra.mxu0 0.0
      %339 = vmatprep.subr.mxu0 0.0
      %340 = vmatpush1.msra.mxu0 0.0
      %341 = vmatprep.subr.mxu0 0.0
      %342 = vmatpush1.msra.mxu0 0.0
      %343 = vmatprep.subr.mxu0 0.0
      %344 = vmatpush1.msra.mxu0 0.0
      %345 = vmatprep.subr.mxu0 0.0
      %346 = vmatpush1.msra.mxu0 0.0
      %347 = vmatprep.subr.mxu0 0.0
      %348 = vmatpush1.msra.mxu0 0.0
      %349 = vmatprep.subr.mxu0 0.0
      %350 = vmatpush1.msra.mxu0 0.0
      %351 = vmatprep.subr.mxu0 0.0
      %352 = vmatpush1.msra.mxu0 0.0
      %353 = vmatprep.subr.mxu0 0.0
      %354 = vmatpush1.msra.mxu0 0.0
      %355 = vmatprep.subr.mxu0 0.0
      %356 = vmatpush1.msra.mxu0 0.0
      %357 = vmatprep.subr.mxu0 0.0
      %358 = vmatpush1.msra.mxu0 0.0
      %359 = vmatprep.subr.mxu0 0.0
      %360 = vmatpush1.msra.mxu0 0.0
      %361 = vmatprep.subr.mxu0 0.0
      %362 = vmatpush1.msra.mxu0 0.0
      %363 = vmatprep.subr.mxu0 0.0
      %364 = vmatpush1.msra.mxu0 0.0
      %365 = vmatprep.subr.mxu0 0.0
      %366 = vmatpush1.msra.mxu0 0.0
      %367 = vmatprep.subr.mxu0 0.0
      %368 = vmatpush1.msra.mxu0 0.0
      %369 = vmatprep.subr.mxu0 0.0
      %370 = vmatpush1.msra.mxu0 0.0
      %371 = vmatprep.subr.mxu0 0.0
      %372 = vmatpush1.msra.mxu0 0.0
      %373 = vmatprep.subr.mxu0 0.0
      %374 = vmatpush1.msra.mxu0 0.0
      %375 = vmatprep.subr.mxu0 0.0
      %376 = vmatpush1.msra.mxu0 0.0
      %377 = vmatprep.subr.mxu0 0.0
      %378 = vmatpush1.msra.mxu0 0.0
      %379 = vmatprep.subr.mxu0 0.0
      %380 = vmatpush1.msra.mxu0 0.0
      %381 = vmatprep.subr.mxu0 0.0
      %382 = vmatpush1.msra.mxu0 0.0
      %383 = vmatprep.subr.mxu0 0.0
      %384 = vmatpush1.msra.mxu0 0.0
      %385 = vmatprep.subr.mxu0 0.0
      %386 = vmatpush1.msra.mxu0 0.0
      %387 = vmatprep.subr.mxu0 0.0
      %388 = vmatpush1.msra.mxu0 0.0
      %389 = vmatprep.subr.mxu0 0.0
      %390 = vmatpush1.msra.mxu0 0.0
      %391 = vmatprep.subr.mxu0 0.0
      %392 = vmatpush1.msra.mxu0 0.0
      %393 = vmatprep.subr.mxu0 0.0
      %394 = vmatpush1.msra.mxu0 0.0
      %395 = vmatprep.subr.mxu0 0.0
      %396 = vmatpush1.msra.mxu0 0.0
      %397 = vmatprep.subr.mxu0 0.0
      %398 = vmatpush1.msra.mxu0 0.0
      %399 = vmatprep.mubr.f32.mxu0 0.0
      %400 = vmatmul.mubr.f32.gmra.mrb[0].mxu0 %v333
      %v401 = vpop.f32.mrb[0].mxu0
      %v402 = vadd.f32 %v330, %v401
      %v403 = vpop.f32.mrb[0].mxu0
      %404 = vdwg.mxu0
      %v405 = vadd.f32 %v402, 3.0
      %v406 = vmax.f32 %v405, 0.0
      %v407 = vmin.f32 %v406, 6.0
      %v408 = vmul.f32 %v407, 0.16666667
      %v409 = vlaneseq
      %v410 = vshrl.u32 %v409, 7
      %v411 = vsub.s32 0, %v410
      %v412 = vrot.slane %v408, %v411
      %414 = vbcast.lane.b32.xlu0 %v412, 256
      %v415 = vpop.permute.xlu0 %414
      %s417 = sor.u32 256, 8
      %418 = vbcast.lane.b32.xlu0 %v412, %s417
      %v419 = vpop.permute.xlu0 %418
      %v420 = vmul.f32 %v225, %v415
      %v421 = vmul.f32 %v226, %v415
      %v422 = vmul.f32 %v227, %v419
      %v423 = vmul.f32 %v228, %v419
      %424 = vst [vmem:[%s224] sm:$0xff] %v420
      %425 = vst [vmem:[%s224 + $0x8] sm:$0xff] %v421
      %426 = vst [vmem:[%s224 + $0x10] sm:$0xff] %v422
      %427 = vst [vmem:[%s224 + $0x18] sm:$0xff] %v423
      %p428 = scmp.lt.s32.totalorder %s16, 1
      %s429 = scalar_select %p428, %s16, 1
      %s430 = smul.addr %s429, 4
      %s431 = smul.addr %s430, 8
      %s432 = scalar_lea.vmem %s5, %s431
      // Predicated region
      $region41: #{_se_layer_impl.1} parent=39 // pred_check
        %p433 = pneg %p144
      $region42: #{_se_layer_impl.1} parent=39 // pred_check_branch
        %435 = sbr.rel (%p433) target = $region44
      $region43: #{_se_layer_impl.1} parent=39 // pred_region
        _
      $region44: #{_se_layer_impl.1} parent=39 // pred_fallthru
        _
    $region40: #{_se_layer_impl.1} parent=5 // pred_fallthru
      _
    %p436 = scmp.le.s32.totalorder 2, %s11
    // Predicated region
    $region45: #{_se_layer_impl.1} parent=5 // pred_check
      %p437 = pneg %p436
    $region46: #{_se_layer_impl.1} parent=5 // pred_check_branch
      %439 = sbr.rel (%p437) target = $region48
    $region47: #{_se_layer_impl.1} parent=5 // pred_region
      %s440 = ssub.s32 %s11, 2
      // Predicated region
      $region49: #{_se_layer_impl.1} parent=47 // pred_check
        %p441 = pneg %p150
      $region50: #{_se_layer_impl.1} parent=47 // pred_check_branch
        %443 = sbr.rel (%p441) target = $region52
      $region51: #{_se_layer_impl.1} parent=47 // pred_region
        %p444 = scmp.lt.s32.totalorder %s17, 1
        %s445 = scalar_select %p444, %s17, 1
        %s446 = smul.addr %s445, 4
        %s447 = smul.addr %s446, 8
        %s448 = scalar_lea.vmem %s5, %s447
      $region52: #{_se_layer_impl.1} parent=47 // pred_fallthru
        _
    $region48: #{_se_layer_impl.1} parent=5 // pred_fallthru
      _
  $region6: #{_se_layer_impl.1} parent=0 // loop_footer
    %s15 = sadd.s32 1, %s11
  $region7: #{_se_layer_impl.1} parent=0 // loop_footer_branch
    %10 = sbr.rel target = $region3
  $region8: #{_se_layer_impl.1} parent=0 // loop_exit
    _

</llo_original>
